<compile_context>
chip_gen: v5e
topology: v5e:2x2
jax: 0.10.0
libtpu: 0.0.40
codegen_flags: <defaults>
</compile_context>

<pallas_src>
import jax
import jax.numpy as jnp
from jax.experimental import pallas as pl
from jax.experimental.pallas import tpu as pltpu

EPS = 1e-05


# ---------------------------------------------------------------------------
# Kernels: accumulate I = sum(yp*yt) and S = sum(yp+yt) over the row axis,
# directly into the output refs (resident across the innermost grid axis).
# ---------------------------------------------------------------------------
def _sum_kernel(yp_ref, yt_ref, i_ref, s_ref):
    ri = pl.program_id(2)

    @pl.when(ri == 0)
    def _():
        i_ref[...] = jnp.zeros_like(i_ref)
        s_ref[...] = jnp.zeros_like(s_ref)

    yp = yp_ref[...].astype(jnp.float32)                        # (1, tr, tl)
    yt = yt_ref[...].astype(jnp.float32)
    i_ref[...] += jnp.sum(yp * yt, axis=1, keepdims=True)       # (1, 1, tl)
    s_ref[...] += jnp.sum(yp + yt, axis=1, keepdims=True)


def _sum_kernel_weighted(yp_ref, yt_ref, w_ref, i_ref, s_ref):
    ri = pl.program_id(2)

    @pl.when(ri == 0)
    def _():
        i_ref[...] = jnp.zeros_like(i_ref)
        s_ref[...] = jnp.zeros_like(s_ref)

    yp = yp_ref[...].astype(jnp.float32)                        # (1, tr, tl)
    yt = yt_ref[...].astype(jnp.float32)
    w = w_ref[...].astype(jnp.float32)
    i_ref[...] += jnp.sum(yp * yt * w, axis=1, keepdims=True)   # (1, 1, tl)
    s_ref[...] += jnp.sum((yp + yt) * w, axis=1, keepdims=True)


# ---------------------------------------------------------------------------
# Tiling heuristics
# ---------------------------------------------------------------------------
def _choose_fold(ch, w, max_lanes=512):
    """Fold factor k | ch so the lane width k*w is (near) a multiple of 128."""
    if w >= 128 or w == 0 or ch <= 1:
        return 1

    def key(k):
        lanes = k * w
        padded = ((lanes + 127) // 128) * 128
        return (lanes / padded, lanes)          # maximize utilization, then width

    best = 1
    kmax = min(ch, max_lanes // w)
    for k in range(2, kmax + 1):
        if ch % k == 0 and key(k) > key(best):
            best = k
    return best


def _choose_lane_tile(lanes, target=512):
    """Full width, or a multiple-of-128 divisor of the lane width (lane-dense)."""
    if lanes <= target or lanes % 128 != 0:
        return lanes
    for d in range(target, 127, -128):
        if lanes % d == 0:
            return d
    return 128  # unreachable: 128 always divides lanes here


def _choose_row_tile(rows, lane_width, itemsize,
                     target_bytes=2 * 1024 * 1024,
                     max_bytes=4 * 1024 * 1024):
    """Reduction-axis tile: (tile_rows, padded_rows).

    Accounts for the lane padding to 128 when computing VMEM footprint.
    tile_rows is a multiple of 8 unless it equals the full row extent.
    """
    lanes_padded = ((lane_width + 127) // 128) * 128
    row_bytes = max(1, lanes_padded * itemsize)
    max_rows = max(8, target_bytes // row_bytes)
    if rows <= max_rows:
        return rows, rows
    cap = (max_rows // 8) * 8
    for d in range(cap, 7, -8):
        if rows % d == 0:
            return d, rows
    if rows * row_bytes <= max_bytes:
        return rows, rows
    # Rare: no aligned divisor and too big for one block -> zero-pad the
    # reduction axis (zeros add nothing; costs one extra HBM copy via jnp.pad).
    tile = cap
    padded = ((rows + tile - 1) // tile) * tile
    return tile, padded


# ---------------------------------------------------------------------------
# Public entry point
# ---------------------------------------------------------------------------
def soft_jaccard_instance_coef(y_pred, y_true, pixel_weights=1):
    """JAX/Pallas equivalent of SoftJaccardInstanceCoef.forward.

    y_pred, y_true: (B, C, H, W) arrays (any float dtype; kept native for DMA).
    pixel_weights:  scalar (Python number or size-1 array, default 1) or an
                    array broadcastable to (B, C, H, W).
    Returns: (B, W) float32 array, matching torch .sum(dim=(1, 2)) on NCHW.
    """
    y_pred = jnp.asarray(y_pred)
    y_true = jnp.asarray(y_true)
    if y_pred.ndim != 4 or y_pred.shape != y_true.shape:
        raise ValueError("y_pred / y_true must both be (B, C, H, W)")
    B, C, H, W = y_pred.shape
    CH = C * H

    # Classify the weights: scalar weights never touch HBM (applied in the
    # tiny epilogue); full per-pixel weights use the 3-input kernel.
    scalar_w = None
    pw_full = None
    if isinstance(pixel_weights, (bool, int, float)):
        if float(pixel_weights) != 1.0:
            scalar_w = jnp.float32(float(pixel_weights))
    else:
        pw = jnp.asarray(pixel_weights)
        if pw.size == 1:
            scalar_w = pw.reshape(()).astype(jnp.float32)
        else:
            # TODO(synk): partially-broadcast weights (e.g. (B,1,1,W)) are
            # materialized to the full shape here; axis-factored kernels could
            # avoid that extra HBM traffic.
            pw_full = jnp.broadcast_to(pw, (B, C, H, W))

    itemsize = max(
        jnp.dtype(y_pred.dtype).itemsize,
        jnp.dtype(y_true.dtype).itemsize,
        jnp.dtype(pw_full.dtype).itemsize if pw_full is not None else 1,
    )

    # Lane folding + tiling.
    k = _choose_fold(CH, W)
    L = k * W                    # lane width seen by the kernel
    R = CH // k                  # reduction-axis rows seen by the kernel

    tl = _choose_lane_tile(L)
    tile_r, padded_R = _choose_row_tile(R, tl, itemsize)

    def prep(x):
        x = x.reshape(B, R, L)   # contiguous reshape: free
        if padded_R != R:
            x = jnp.pad(x, ((0, 0), (0, padded_R - R), (0, 0)))
        return x

    operands = [prep(y_pred), prep(y_true)]
    kernel = _sum_kernel
    if pw_full is not None:
        operands.append(prep(pw_full))
        kernel = _sum_kernel_weighted

    n_l = L // tl
    n_r = padded_R // tile_r
    grid = (B, n_l, n_r)

    in_spec = pl.BlockSpec((1, tile_r, tl), lambda b, li, ri: (b, ri, li))
    out_spec = pl.BlockSpec((1, 1, tl), lambda b, li, ri: (b, 0, li))

    out_i, out_s = pl.pallas_call(
        kernel,
        out_shape=(jax.ShapeDtypeStruct((B, 1, L), jnp.float32),
                   jax.ShapeDtypeStruct((B, 1, L), jnp.float32)),
        grid_spec=pltpu.PrefetchScalarGridSpec(
            num_scalar_prefetch=0,
            grid=grid,
            in_specs=[in_spec] * len(operands),
            out_specs=[out_spec, out_spec],
        ),
        compiler_params=pltpu.CompilerParams(
            dimension_semantics=("parallel", "parallel", "arbitrary"),
            vmem_limit_bytes=32 * 1024 * 1024,
        ),
    )(*operands)

    # Tiny O(B*k*W) epilogue: combine fold groups, apply scalar weight, IoU.
    I = out_i.reshape(B, k, W).sum(axis=1)
    S = out_s.reshape(B, k, W).sum(axis=1)
    if scalar_w is not None:
        I = I * scalar_w
        S = S * scalar_w
    U = S - I
    return (EPS + I) / (EPS + U)


# ---------------------------------------------------------------------------
# Self-test
# ---------------------------------------------------------------------------
if __name__ == "__main__":
    key = jax.random.PRNGKey(0)
    k1, k2, k3 = jax.random.split(key, 3)

    B, C, H, W = 2, 4, 16, 16
    y_pred = jax.nn.sigmoid(jax.random.normal(k1, (B, C, H, W), jnp.float32))
    y_true = (jax.random.uniform(k2, (B, C, H, W)) > 0.5).astype(jnp.float32)
    pixel_weights = jax.random.uniform(k3, (B, C, H, W), jnp.float32)

    def ref_iou(yp, yt, w=1.0):
        yp = yp.astype(jnp.float32)
        yt = yt.astype(jnp.float32)
        w = jnp.asarray(w, jnp.float32)
        I = (yp * yt * w).sum(axis=(1, 2))
        U = (yp * w).sum(axis=(1, 2)) + (yt * w).sum(axis=(1, 2)) - I
        return (EPS + I) / (EPS + U)

    # Full per-pixel-weight path (f32).
    out_w = jax.block_until_ready(soft_jaccard_instance_coef(y_pred, y_true, pixel_weights))
    assert out_w.shape == (B, W), out_w.shape
    assert jnp.allclose(out_w, ref_iou(y_pred, y_true, pixel_weights), rtol=1e-5, atol=1e-6)

    # Default scalar-weight path (no third HBM input, nothing broadcast).
    out_d = jax.block_until_ready(soft_jaccard_instance_coef(y_pred, y_true))
    assert jnp.allclose(out_d, ref_iou(y_pred, y_true), rtol=1e-5, atol=1e-6)

    # Non-unit static scalar weight.
    out_s = jax.block_until_ready(soft_jaccard_instance_coef(y_pred, y_true, 2.0))
    assert jnp.allclose(out_s, ref_iou(y_pred, y_true, 2.0), rtol=1e-5, atol=1e-6)

    # Traced 0-d scalar weight (handled without any HBM weight array).
    w_traced = jnp.float32(0.5)
    out_t = jax.block_until_ready(soft_jaccard_instance_coef(y_pred, y_true, w_traced))
    assert jnp.allclose(out_t, ref_iou(y_pred, y_true, 0.5), rtol=1e-5, atol=1e-6)

    # bf16 inputs stay bf16 on the HBM->VMEM DMA; accumulation is f32 in-kernel.
    yp16 = y_pred.astype(jnp.bfloat16)
    yt16 = y_true.astype(jnp.bfloat16)
    out_bf16 = jax.block_until_ready(soft_jaccard_instance_coef(yp16, yt16))
    assert jnp.allclose(out_bf16, ref_iou(yp16, yt16), rtol=1e-3, atol=1e-3)

    # Lane-dense (W multiple of 128) path: exercises the no-fold branch.
    B2, C2, H2, W2 = 1, 2, 8, 128
    yp2 = jax.nn.sigmoid(jax.random.normal(k1, (B2, C2, H2, W2), jnp.float32))
    yt2 = (jax.random.uniform(k2, (B2, C2, H2, W2)) > 0.5).astype(jnp.float32)
    out2 = jax.block_until_ready(soft_jaccard_instance_coef(yp2, yt2))
    assert out2.shape == (B2, W2)
    assert jnp.allclose(out2, ref_iou(yp2, yt2), rtol=1e-5, atol=1e-6)

    print("KERNEL_OK")
</pallas_src>

<mosaic_0001>
module attributes {stable_mosaic.version = 11 : i64} {
  func.func @_sum_kernel_weighted(%arg0: i32, %arg1: i32, %arg2: i32, %arg3: memref<1x2x512xf32, #tpu.memory_space<vmem>>, %arg4: memref<1x2x512xf32, #tpu.memory_space<vmem>>, %arg5: memref<1x2x512xf32, #tpu.memory_space<vmem>>, %arg6: memref<1x1x512xf32, #tpu.memory_space<vmem>>, %arg7: memref<1x1x512xf32, #tpu.memory_space<vmem>>) attributes {dimension_semantics = [#tpu.dimension_semantics<parallel>, #tpu.dimension_semantics<parallel>, #tpu.dimension_semantics<arbitrary>], iteration_bounds = array<i64: 2, 1, 1>, scalar_prefetch = 0 : i64, scratch_operands = 0 : i64, tpu.core_type = #tpu.core_type<tc>, window_params = [{transform_indices = @transform_0, window_bounds = array<i64: 1, 2, 512>}, {transform_indices = @transform_1, window_bounds = array<i64: 1, 2, 512>}, {transform_indices = @transform_2, window_bounds = array<i64: 1, 2, 512>}, {transform_indices = @transform_3, window_bounds = array<i64: 1, 1, 512>}, {transform_indices = @transform_4, window_bounds = array<i64: 1, 1, 512>}]} {
    %c0_i32 = arith.constant 0 : i32
    %0 = arith.cmpi eq, %arg2, %c0_i32 : i32
    %1 = arith.extui %0 : i1 to i32
    %c0_i32_0 = arith.constant 0 : i32
    %2 = arith.cmpi ne, %1, %c0_i32_0 : i32
    scf.if %2 {
      %cst_22 = arith.constant 0.000000e+00 : f32
      %20 = vector.broadcast %cst_22 : f32 to vector<1x1x512xf32>
      %c0_23 = arith.constant 0 : index
      %c0_24 = arith.constant 0 : index
      %c0_25 = arith.constant 0 : index
      %21 = vector.load %arg6[%c0_23, %c0_24, %c0_25] : memref<1x1x512xf32, #tpu.memory_space<vmem>>, vector<1x1x512xf32>
      tpu.vector_store %arg6[%c0_23, %c0_24, %c0_25], %20 {strides = array<i32>} : memref<1x1x512xf32, #tpu.memory_space<vmem>>, vector<1x1x512xf32>,
      %cst_26 = arith.constant 0.000000e+00 : f32
      %22 = vector.broadcast %cst_26 : f32 to vector<1x1x512xf32>
      %c0_27 = arith.constant 0 : index
      %c0_28 = arith.constant 0 : index
      %c0_29 = arith.constant 0 : index
      %23 = vector.load %arg7[%c0_27, %c0_28, %c0_29] : memref<1x1x512xf32, #tpu.memory_space<vmem>>, vector<1x1x512xf32>
      tpu.vector_store %arg7[%c0_27, %c0_28, %c0_29], %22 {strides = array<i32>} : memref<1x1x512xf32, #tpu.memory_space<vmem>>, vector<1x1x512xf32>,
    } else {
    }
    %c0 = arith.constant 0 : index
    %c0_1 = arith.constant 0 : index
    %c0_2 = arith.constant 0 : index
    %3 = vector.load %arg3[%c0, %c0_1, %c0_2] : memref<1x2x512xf32, #tpu.memory_space<vmem>>, vector<1x2x512xf32>
    %c0_3 = arith.constant 0 : index
    %c0_4 = arith.constant 0 : index
    %c0_5 = arith.constant 0 : index
    %4 = vector.load %arg4[%c0_3, %c0_4, %c0_5] : memref<1x2x512xf32, #tpu.memory_space<vmem>>, vector<1x2x512xf32>
    %c0_6 = arith.constant 0 : index
    %c0_7 = arith.constant 0 : index
    %c0_8 = arith.constant 0 : index
    %5 = vector.load %arg5[%c0_6, %c0_7, %c0_8] : memref<1x2x512xf32, #tpu.memory_space<vmem>>, vector<1x2x512xf32>
    %c0_9 = arith.constant 0 : index
    %c0_10 = arith.constant 0 : index
    %c0_11 = arith.constant 0 : index
    %6 = vector.load %arg6[%c0_9, %c0_10, %c0_11] : memref<1x1x512xf32, #tpu.memory_space<vmem>>, vector<1x1x512xf32>
    %7 = arith.mulf %3, %4 : vector<1x2x512xf32>
    %8 = arith.mulf %7, %5 : vector<1x2x512xf32>
    %cst = arith.constant dense<0.000000e+00> : vector<1x512xf32>
    %9 = vector.multi_reduction <add>, %8, %cst [1] : vector<1x2x512xf32> to vector<1x512xf32>
    %10 = vector.shape_cast %9 : vector<1x512xf32> to vector<1x1x512xf32>
    %11 = arith.addf %6, %10 : vector<1x1x512xf32>
    %c0_12 = arith.constant 0 : index
    %c0_13 = arith.constant 0 : index
    %c0_14 = arith.constant 0 : index
    %12 = vector.load %arg6[%c0_12, %c0_13, %c0_14] : memref<1x1x512xf32, #tpu.memory_space<vmem>>, vector<1x1x512xf32>
    tpu.vector_store %arg6[%c0_12, %c0_13, %c0_14], %11 {strides = array<i32>} : memref<1x1x512xf32, #tpu.memory_space<vmem>>, vector<1x1x512xf32>,
    %c0_15 = arith.constant 0 : index
    %c0_16 = arith.constant 0 : index
    %c0_17 = arith.constant 0 : index
    %13 = vector.load %arg7[%c0_15, %c0_16, %c0_17] : memref<1x1x512xf32, #tpu.memory_space<vmem>>, vector<1x1x512xf32>
    %14 = arith.addf %3, %4 : vector<1x2x512xf32>
    %15 = arith.mulf %14, %5 : vector<1x2x512xf32>
    %cst_18 = arith.constant dense<0.000000e+00> : vector<1x512xf32>
    %16 = vector.multi_reduction <add>, %15, %cst_18 [1] : vector<1x2x512xf32> to vector<1x512xf32>
    %17 = vector.shape_cast %16 : vector<1x512xf32> to vector<1x1x512xf32>
    %18 = arith.addf %13, %17 : vector<1x1x512xf32>
    %c0_19 = arith.constant 0 : index
    %c0_20 = arith.constant 0 : index
    %c0_21 = arith.constant 0 : index
    %19 = vector.load %arg7[%c0_19, %c0_20, %c0_21] : memref<1x1x512xf32, #tpu.memory_space<vmem>>, vector<1x1x512xf32>
    tpu.vector_store %arg7[%c0_19, %c0_20, %c0_21], %18 {strides = array<i32>} : memref<1x1x512xf32, #tpu.memory_space<vmem>>, vector<1x1x512xf32>,
    return
  }
  func.func @transform_0(%arg0: i32, %arg1: i32, %arg2: i32) -> (i32, i32, i32) {
    %c0_i32 = arith.constant 0 : i32
    return %arg0, %arg2, %arg1 : i32, i32, i32
  }
  func.func @transform_1(%arg0: i32, %arg1: i32, %arg2: i32) -> (i32, i32, i32) {
    %c0_i32 = arith.constant 0 : i32
    return %arg0, %arg2, %arg1 : i32, i32, i32
  }
  func.func @transform_2(%arg0: i32, %arg1: i32, %arg2: i32) -> (i32, i32, i32) {
    %c0_i32 = arith.constant 0 : i32
    return %arg0, %arg2, %arg1 : i32, i32, i32
  }
  func.func @transform_3(%arg0: i32, %arg1: i32, %arg2: i32) -> (i32, i32, i32) {
    %c0_i32 = arith.constant 0 : i32
    %c0_i32_0 = arith.constant 0 : i32
    return %arg0, %c0_i32, %arg1 : i32, i32, i32
  }
  func.func @transform_4(%arg0: i32, %arg1: i32, %arg2: i32) -> (i32, i32, i32) {
    %c0_i32 = arith.constant 0 : i32
    %c0_i32_0 = arith.constant 0 : i32
    return %arg0, %c0_i32, %arg1 : i32, i32, i32
  }
}

</mosaic_0001>

<llo_original>
// kernel: tpu_custom_call.1
$region0: #{tpu_custom_call.1}
  #allocation0 [shape = 'u32[]', space=smem, size = 0x4, offset = 0x4, fixed_abs, tag = 'smem constant byte address 0x4 - core index']
  #allocation1 [shape = 'u32[72,128]{1,0:T(1,128)}', space=vmem, size = 0x9000, scoped, tag = 'internal scratch']
  %s0 = inlined_call_operand.hbm [shape: f32[2,2,512], index: 0, kind: input, shape index: {}]
  %s1 = inlined_call_operand.hbm [shape: f32[2,2,512], index: 1, kind: input, shape index: {}]
  %s2 = inlined_call_operand.hbm [shape: f32[2,2,512], index: 2, kind: input, shape index: {}]
  %s3 = inlined_call_operand.hbm [shape: f32[2,1,512], index: 3, kind: output, shape index: {0}]
  %s4 = inlined_call_operand.hbm [shape: f32[2,1,512], index: 4, kind: output, shape index: {1}]
  %5 = xla_tuple %s3, %s4
  %s6 = sld [smem:[#allocation0]]
  $region69: #{tpu_custom_call.1} parent=0
    _
  %s8 = ssub.s32 1, %s6
  %s9 = scalar_select 0, %s8, %s6
  $region1: #{tpu_custom_call.1} parent=0
    #allocation2 [shape = 'u8[8192]{0}', space=vmem, size = 0x2000, scoped, tag = 'input window, operand 0']
    #allocation3 [shape = 's32[2]{0}', space=sflag, size = 0x8, scoped, tag = 'scoped memory for tpu_custom_call.1']
    #allocation4 [shape = 's32[2]{0}', space=sflag, size = 0x8, scoped, tag = 'scoped memory for tpu_custom_call.1']
    #allocation5 [shape = 'u8[8192]{0}', space=vmem, size = 0x2000, scoped, tag = 'input window, operand 1']
    #allocation6 [shape = 's32[2]{0}', space=sflag, size = 0x8, scoped, tag = 'scoped memory for tpu_custom_call.1']
    #allocation7 [shape = 'u8[8192]{0}', space=vmem, size = 0x2000, scoped, tag = 'input window, operand 2']
    #allocation8 [shape = 'u8[4096]{0}', space=vmem, size = 0x1000, scoped, tag = 'output window, operand 0']
    #allocation9 [shape = 'u8[4096]{0}', space=vmem, size = 0x1000, scoped, tag = 'output window, operand 1']
    #allocation10 [shape = 's32[2]{0}', space=sflag, size = 0x8, scoped, tag = 'scoped memory for tpu_custom_call.1']
    %10 = vsyncpa [#allocation3], 0
    %s11 = scalar_lea.sflag [#allocation3], 1
    %12 = vsyncpa %s11, 0
    %13 = vsyncpa [#allocation6], 0
    %s14 = scalar_lea.sflag [#allocation6], 1
    %15 = vsyncpa %s14, 0
    %16 = vsyncpa [#allocation4], 0
    %s17 = scalar_lea.sflag [#allocation4], 1
    %18 = vsyncpa %s17, 0
    %19 = vsyncpa [#allocation10], 0
    %s20 = scalar_lea.sflag [#allocation10], 1
    %21 = vsyncpa %s20, 0
    loop: start=0, step=1, limit=4
    $region2: #{tpu_custom_call.1} parent=1 // loop_pre_header
      _
    $region3: #{tpu_custom_call.1} parent=1 // loop_header
      %s23 = sphi 0, %s27
      %p24 = scmp.ge.s32.totalorder %s23, 4
      %s30 = sphi 0, %s49
      %s31 = sphi 0, %s45
      %s32 = sphi 0, %s41
      %s33 = sphi 0, %s30
      %s34 = sphi 0, %s31
      %s35 = sphi 0, %s32
      %s36 = sphi 0, %s33
      %s37 = sphi 0, %s34
      %s38 = sphi 0, %s35
      %s56 = sphi 0, %s58
      %s59 = sphi 0, %s56
      %s60 = sphi 0, %s59
      %s76 = sphi 0, %s60
      %s86 = sphi 0, %s88
      %s89 = sphi 0, %s86
      %s90 = sphi 0, %s89
      %s106 = sphi 0, %s90
      %s116 = sphi 0, %s118
      %s119 = sphi 0, %s116
      %s120 = sphi 0, %s119
      %s136 = sphi 0, %s120
      %s144 = sphi 0, %s146
      %s147 = sphi 0, %s144
      %s148 = sphi 0, %s147
      %s164 = sphi 0, %s148
      %s172 = sphi 0, %s174
      %s175 = sphi 0, %s172
      %s176 = sphi 0, %s175
      %s192 = sphi 0, %s176
    $region4: #{tpu_custom_call.1} parent=1 // loop_header_branch
      %26 = sbr.rel (%p24) target = $region8
    $region5: #{tpu_custom_call.1} parent=1 // loop_body
      %s28 = ssub.s32 %s23, 1
      %s29 = ssub.s32 %s23, 2
      %s39 = sadd.s32 1, %s32
      %p40 = scmp.ge.s32.totalorder %s39, 1
      %s41 = scalar_select %p40, 0, %s39
      %s42 = sadd.s32 1, %s31
      %s43 = scalar_select %p40, %s42, %s31
      %p44 = scmp.ge.s32.totalorder %s43, 1
      %s45 = scalar_select %p44, 0, %s43
      %s46 = sadd.s32 1, %s30
      %s47 = scalar_select %p44, %s46, %s30
      %p48 = scmp.ge.s32.totalorder %s47, 2
      %s49 = scalar_select %p48, 0, %s47
      %s50 = ssub.s32 %s30, %s49
      %s51 = ssub.s32 %s32, %s41
      %s52 = sor.u32 %s50, %s51
      %s53 = ssub.s32 %s31, %s45
      %s54 = sor.u32 %s52, %s53
      %p55 = scmp.eq.s32.totalorder %s54, 0
      %s57 = sadd.s32 %s56, 1
      %s58 = scalar_select %p55, %s56, %s57
      %p61 = pneg %p55
      %p62 = scmp.eq.s32.totalorder %s23, 1
      %p63 = por %p61, %p62
      %p64 = scmp.ne.s32.totalorder %s56, %s59
      %p65 = scmp.eq.s32.totalorder %s23, 0
      %p66 = por %p64, %p65
      %p67 = scmp.ne.s32.totalorder %s56, %s59
      %p68 = scmp.eq.s32.totalorder %s28, 1
      %p69 = por %p67, %p68
      %p70 = scmp.ne.s32.totalorder %s59, %s60
      %p71 = scmp.eq.s32.totalorder %s28, 0
      %p72 = por %p70, %p71
      %p73 = scmp.ne.s32.totalorder %s59, %s60
      %p74 = scmp.eq.s32.totalorder %s29, 1
      %p75 = por %p73, %p74
      %p77 = scmp.ne.s32.totalorder %s60, %s76
      %p78 = scmp.eq.s32.totalorder %s29, 0
      %p79 = por %p77, %p78
      %s80 = ssub.s32 %s30, %s49
      %s81 = ssub.s32 %s32, %s41
      %s82 = sor.u32 %s80, %s81
      %s83 = ssub.s32 %s31, %s45
      %s84 = sor.u32 %s82, %s83
      %p85 = scmp.eq.s32.totalorder %s84, 0
      %s87 = sadd.s32 %s86, 1
      %s88 = scalar_select %p85, %s86, %s87
      %p91 = pneg %p85
      %p92 = scmp.eq.s32.totalorder %s23, 1
      %p93 = por %p91, %p92
      %p94 = scmp.ne.s32.totalorder %s86, %s89
      %p95 = scmp.eq.s32.totalorder %s23, 0
      %p96 = por %p94, %p95
      %p97 = scmp.ne.s32.totalorder %s86, %s89
      %p98 = scmp.eq.s32.totalorder %s28, 1
      %p99 = por %p97, %p98
      %p100 = scmp.ne.s32.totalorder %s89, %s90
      %p101 = scmp.eq.s32.totalorder %s28, 0
      %p102 = por %p100, %p101
      %p103 = scmp.ne.s32.totalorder %s89, %s90
      %p104 = scmp.eq.s32.totalorder %s29, 1
      %p105 = por %p103, %p104
      %p107 = scmp.ne.s32.totalorder %s90, %s106
      %p108 = scmp.eq.s32.totalorder %s29, 0
      %p109 = por %p107, %p108
      %s110 = ssub.s32 %s30, %s49
      %s111 = ssub.s32 %s32, %s41
      %s112 = sor.u32 %s110, %s111
      %s113 = ssub.s32 %s31, %s45
      %s114 = sor.u32 %s112, %s113
      %p115 = scmp.eq.s32.totalorder %s114, 0
      %s117 = sadd.s32 %s116, 1
      %s118 = scalar_select %p115, %s116, %s117
      %p121 = pneg %p115
      %p122 = scmp.eq.s32.totalorder %s23, 1
      %p123 = por %p121, %p122
      %p124 = scmp.ne.s32.totalorder %s116, %s119
      %p125 = scmp.eq.s32.totalorder %s23, 0
      %p126 = por %p124, %p125
      %p127 = scmp.ne.s32.totalorder %s116, %s119
      %p128 = scmp.eq.s32.totalorder %s28, 1
      %p129 = por %p127, %p128
      %p130 = scmp.ne.s32.totalorder %s119, %s120
      %p131 = scmp.eq.s32.totalorder %s28, 0
      %p132 = por %p130, %p131
      %p133 = scmp.ne.s32.totalorder %s119, %s120
      %p134 = scmp.eq.s32.totalorder %s29, 1
      %p135 = por %p133, %p134
      %p137 = scmp.ne.s32.totalorder %s120, %s136
      %p138 = scmp.eq.s32.totalorder %s29, 0
      %p139 = por %p137, %p138
      %s140 = ssub.s32 %s30, %s49
      %s141 = ssub.s32 %s31, %s45
      %s142 = sor.u32 %s140, %s141
      %p143 = scmp.eq.s32.totalorder %s142, 0
      %s145 = sadd.s32 %s144, 1
      %s146 = scalar_select %p143, %s144, %s145
      %p149 = pneg %p143
      %p150 = scmp.eq.s32.totalorder %s23, 1
      %p151 = por %p149, %p150
      %p152 = scmp.ne.s32.totalorder %s144, %s147
      %p153 = scmp.eq.s32.totalorder %s23, 0
      %p154 = por %p152, %p153
      %p155 = scmp.ne.s32.totalorder %s144, %s147
      %p156 = scmp.eq.s32.totalorder %s28, 1
      %p157 = por %p155, %p156
      %p158 = scmp.ne.s32.totalorder %s147, %s148
      %p159 = scmp.eq.s32.totalorder %s28, 0
      %p160 = por %p158, %p159
      %p161 = scmp.ne.s32.totalorder %s147, %s148
      %p162 = scmp.eq.s32.totalorder %s29, 1
      %p163 = por %p161, %p162
      %p165 = scmp.ne.s32.totalorder %s148, %s164
      %p166 = scmp.eq.s32.totalorder %s29, 0
      %p167 = por %p165, %p166
      %s168 = ssub.s32 %s30, %s49
      %s169 = ssub.s32 %s31, %s45
      %s170 = sor.u32 %s168, %s169
      %p171 = scmp.eq.s32.totalorder %s170, 0
      %s173 = sadd.s32 %s172, 1
      %s174 = scalar_select %p171, %s172, %s173
      %p177 = pneg %p171
      %p178 = scmp.eq.s32.totalorder %s23, 1
      %p179 = por %p177, %p178
      %p180 = scmp.ne.s32.totalorder %s172, %s175
      %p181 = scmp.eq.s32.totalorder %s23, 0
      %p182 = por %p180, %p181
      %p183 = scmp.ne.s32.totalorder %s172, %s175
      %p184 = scmp.eq.s32.totalorder %s28, 1
      %p185 = por %p183, %p184
      %p186 = scmp.ne.s32.totalorder %s175, %s176
      %p187 = scmp.eq.s32.totalorder %s28, 0
      %p188 = por %p186, %p187
      %p189 = scmp.ne.s32.totalorder %s175, %s176
      %p190 = scmp.eq.s32.totalorder %s29, 1
      %p191 = por %p189, %p190
      %p193 = scmp.ne.s32.totalorder %s176, %s192
      %p194 = scmp.eq.s32.totalorder %s29, 0
      %p195 = por %p193, %p194
      %p196 = scmp.le.s32.totalorder 1, %s23
      %p197 = scmp.lt.s32.totalorder %s23, 3
      %p198 = pnand %p196, %p197
      %p199 = pneg %p198
      // Predicated region
      $region9: #{tpu_custom_call.1} parent=5 // pred_check
        _
      $region10: #{tpu_custom_call.1} parent=5 // pred_check_branch
        %201 = sbr.rel (%p198) target = $region12
      $region11: #{tpu_custom_call.1} parent=5 // pred_region
        %s202 = ssub.s32 %s23, 1
      $region12: #{tpu_custom_call.1} parent=5 // pred_fallthru
        _
      %p203 = scmp.lt.s32.totalorder %s23, 2
      // Predicated region
      $region13: #{tpu_custom_call.1} parent=5 // pred_check
        %p204 = pneg %p203
      $region14: #{tpu_custom_call.1} parent=5 // pred_check_branch
        %206 = sbr.rel (%p204) target = $region16
      $region15: #{tpu_custom_call.1} parent=5 // pred_region
        // Predicated region
        $region17: #{tpu_custom_call.1} parent=15 // pred_check
          %p207 = pneg %p66
        $region18: #{tpu_custom_call.1} parent=15 // pred_check_branch
          %209 = sbr.rel (%p207) target = $region20
        $region19: #{tpu_custom_call.1} parent=15 // pred_region
          %s210 = sand.u32 %s56, 1
          %s211 = scalar_lea.sflag [#allocation3], %s210
          %s212 = sand.u32 %s56, 1
          %s213 = smul.addr %s212, 8
          %s214 = scalar_lea.vmem [#allocation2], %s213
          %s215 = smul.u32 4, %s31
          %217 = vsyncadd %s211, 0
          %s218 = smul.addr %s32, 4
          %s219 = sadd.s32 %s215, %s218
          %s220 = smul.addr %s30, 4
          %s221 = sadd.s32 %s219, %s220
          %s222 = smul.addr %s221, 2
          %s223 = scalar_lea.hbm %s0, %s222
          %s225 = sshll.u32 %s223, 4
          %s226 = int_to_ptr.hbm [resolvable:$true] %s225
          %s227 = sshll.u32 %s214, 4
          %s228 = int_to_ptr.vmem [resolvable:$true] %s227
          %230 = dma.hbm_to_vmem [thread:$0]  %s226, 128, %s228, %s211
        $region20: #{tpu_custom_call.1} parent=15 // pred_fallthru
          _
        // Predicated region
        $region21: #{tpu_custom_call.1} parent=15 // pred_check
          %p231 = pneg %p96
        $region22: #{tpu_custom_call.1} parent=15 // pred_check_branch
          %233 = sbr.rel (%p231) target = $region24
        $region23: #{tpu_custom_call.1} parent=15 // pred_region
          %s234 = sand.u32 %s23, 1
          %s235 = scalar_lea.sflag [#allocation6], %s234
          %s236 = sand.u32 %s86, 1
          %s237 = smul.addr %s236, 8
          %s238 = scalar_lea.vmem [#allocation5], %s237
          %s239 = smul.u32 4, %s31
          %241 = vsyncadd %s235, 0
          %s242 = smul.addr %s32, 4
          %s243 = sadd.s32 %s239, %s242
          %s244 = smul.addr %s30, 4
          %s245 = sadd.s32 %s243, %s244
          %s246 = smul.addr %s245, 2
          %s247 = scalar_lea.hbm %s1, %s246
          %s249 = sshll.u32 %s247, 4
          %s250 = int_to_ptr.hbm [resolvable:$true] %s249
          %s251 = sshll.u32 %s238, 4
          %s252 = int_to_ptr.vmem [resolvable:$true] %s251
          %254 = dma.hbm_to_vmem [thread:$0]  %s250, 128, %s252, %s235
        $region24: #{tpu_custom_call.1} parent=15 // pred_fallthru
          _
        // Predicated region
        $region25: #{tpu_custom_call.1} parent=15 // pred_check
          %p255 = pneg %p126
        $region26: #{tpu_custom_call.1} parent=15 // pred_check_branch
          %257 = sbr.rel (%p255) target = $region28
        $region27: #{tpu_custom_call.1} parent=15 // pred_region
          %s258 = sand.u32 %s23, 1
          %s259 = scalar_lea.sflag [#allocation6], %s258
          %s260 = sand.u32 %s116, 1
          %s261 = smul.addr %s260, 8
          %s262 = scalar_lea.vmem [#allocation7], %s261
          %s263 = smul.u32 4, %s31
          %265 = vsyncadd %s259, 0
          %s266 = smul.addr %s32, 4
          %s267 = sadd.s32 %s263, %s266
          %s268 = smul.addr %s30, 4
          %s269 = sadd.s32 %s267, %s268
          %s270 = smul.addr %s269, 2
          %s271 = scalar_lea.hbm %s2, %s270
          %s273 = sshll.u32 %s271, 4
          %s274 = int_to_ptr.hbm [resolvable:$true] %s273
          %s275 = sshll.u32 %s262, 4
          %s276 = int_to_ptr.vmem [resolvable:$true] %s275
          %278 = dma.hbm_to_vmem [thread:$0]  %s274, 128, %s276, %s259
        $region28: #{tpu_custom_call.1} parent=15 // pred_fallthru
          _
      $region16: #{tpu_custom_call.1} parent=5 // pred_fallthru
        _
      %p279 = scmp.le.s32.totalorder 1, %s23
      %p280 = scmp.lt.s32.totalorder %s23, 3
      %p281 = pnand %p279, %p280
      %p282 = pneg %p281
      // Predicated region
      $region29: #{tpu_custom_call.1} parent=5 // pred_check
        _
      $region30: #{tpu_custom_call.1} parent=5 // pred_check_branch
        %284 = sbr.rel (%p281) target = $region32
      $region31: #{tpu_custom_call.1} parent=5 // pred_region
        %s285 = ssub.s32 %s23, 1
        %s286 = sand.u32 %s59, 1
        %s287 = scalar_lea.sflag [#allocation3], %s286
        %s288 = sand.u32 %s59, 1
        %s289 = smul.addr %s288, 8
        %s290 = scalar_lea.vmem [#allocation2], %s289
        // Predicated region
        $region33: #{tpu_custom_call.1} parent=31 // pred_check
          %p291 = pneg %p72
        $region34: #{tpu_custom_call.1} parent=31 // pred_check_branch
          %293 = sbr.rel (%p291) target = $region36
        $region35: #{tpu_custom_call.1} parent=31 // pred_region
          %295 = dma.done %s287, 128
        $region36: #{tpu_custom_call.1} parent=31 // pred_fallthru
          _
        %s296 = sand.u32 %s28, 1
        %s297 = scalar_lea.sflag [#allocation6], %s296
        %s298 = sand.u32 %s89, 1
        %s299 = smul.addr %s298, 8
        %s300 = scalar_lea.vmem [#allocation5], %s299
        // Predicated region
        $region37: #{tpu_custom_call.1} parent=31 // pred_check
          %p301 = pneg %p102
        $region38: #{tpu_custom_call.1} parent=31 // pred_check_branch
          %303 = sbr.rel (%p301) target = $region40
        $region39: #{tpu_custom_call.1} parent=31 // pred_region
          %305 = dma.done %s297, 128
        $region40: #{tpu_custom_call.1} parent=31 // pred_fallthru
          _
        %s306 = sand.u32 %s28, 1
        %s307 = scalar_lea.sflag [#allocation6], %s306
        %s308 = sand.u32 %s119, 1
        %s309 = smul.addr %s308, 8
        %s310 = scalar_lea.vmem [#allocation7], %s309
        // Predicated region
        $region41: #{tpu_custom_call.1} parent=31 // pred_check
          %p311 = pneg %p132
        $region42: #{tpu_custom_call.1} parent=31 // pred_check_branch
          %313 = sbr.rel (%p311) target = $region44
        $region43: #{tpu_custom_call.1} parent=31 // pred_region
          %315 = dma.done %s307, 128
        $region44: #{tpu_custom_call.1} parent=31 // pred_fallthru
          _
        %s316 = sand.u32 %s59, 1
        %s317 = scalar_lea.sflag [#allocation3], %s316
        %s318 = sand.u32 %s59, 1
        %s319 = smul.addr %s318, 8
        %s320 = scalar_lea.vmem [#allocation2], %s319
        %p321 = pneg %p72
        %p322 = pneg %p69
        %s323 = sand.u32 %s28, 1
        %s324 = scalar_lea.sflag [#allocation6], %s323
        %s325 = sand.u32 %s89, 1
        %s326 = smul.addr %s325, 8
        %s327 = scalar_lea.vmem [#allocation5], %s326
        %p328 = pneg %p102
        %p329 = pneg %p99
        %s330 = sand.u32 %s28, 1
        %s331 = scalar_lea.sflag [#allocation6], %s330
        %s332 = sand.u32 %s119, 1
        %s333 = smul.addr %s332, 8
        %s334 = scalar_lea.vmem [#allocation7], %s333
        %p335 = pneg %p132
        %p336 = pneg %p129
        %p337 = pneg %p160
        %p338 = pneg %p157
        %s339 = sand.u32 %s147, 1
        %s340 = scalar_lea.sflag [#allocation4], %s339
        %s341 = sand.u32 %s147, 1
        %s342 = smul.addr %s341, 4
        %s343 = scalar_lea.vmem [#allocation8], %s342
        %p344 = pneg %p188
        %p345 = pneg %p185
        %s346 = sand.u32 %s175, 1
        %s347 = scalar_lea.sflag [#allocation10], %s346
        %s348 = sand.u32 %s175, 1
        %s349 = smul.addr %s348, 4
        %s350 = scalar_lea.vmem [#allocation9], %s349
        %s351 = smul.u32 4, %s34
        %s352 = smul.u32 4, %s34
        %s353 = smul.u32 4, %s34
        %s354 = smul.u32 4, %s34
        %s355 = smul.u32 4, %s34
        %p356 = scmp.eq.s32.totalorder %s35, 0
        // Predicated region
        $region45: #{tpu_custom_call.1} parent=31 // pred_check
          %p357 = pneg %p356
        $region46: #{tpu_custom_call.1} parent=31 // pred_check_branch
          %359 = sbr.rel (%p357) target = $region48
        $region47: #{tpu_custom_call.1} parent=31 // pred_region
          %v360 = vlaneseq
          %vm361 = vcmp.ge.s32.totalorder %v360, 0
          %vm362 = vcmp.lt.s32.totalorder %v360, 512
          %vm363 = vmand %vm361, %vm362
          %364 = vst.msk [vmem:[%s343] sm:$0xf] %vm363, 0.0
          %365 = vst.msk [vmem:[%s350] sm:$0xf] %vm363, 0.0
        $region48: #{tpu_custom_call.1} parent=31 // pred_fallthru
          _
        %v366 = vld [vmem:[%s290] sm:$0xff]
        %v367 = vld [vmem:[%s300] sm:$0xff]
        %v368 = vld [vmem:[%s310] sm:$0xff]
        %v369 = vld [vmem:[%s343] sm:$0xf]
        %v370 = vmul.f32 %v366, %v367
        %v371 = vmul.f32 %v370, %v368
        %373 = vst [vmem:[#allocation1] ss:$4 sm:$0xff] %v371
        %v374 = vld.sshfl [vmem:[#allocation1] sm:$0xff pattern:$0x73625140]
        %v375 = vld.sshfl [vmem:[#allocation1 + $0x8] sm:$0xff pattern:$0x73625140]
        %v376 = vld.sshfl [vmem:[#allocation1 + $0x10] sm:$0xff pattern:$0x73625140]
        %v377 = vld.sshfl [vmem:[#allocation1 + $0x18] sm:$0xff pattern:$0x73625140]
        %vm382 = vcmask 1041408
        %v383 = vsel %vm382, %v374, 0.0
        %v384 = vrot.slane %v383, 4
        %v385 = vadd.f32 %v383, %v384
        %v386 = vrot.slane %v385, 2
        %v387 = vadd.f32 %v385, %v386
        %v388 = vrot.slane %v387, 1
        %v389 = vadd.f32 %v387, %v388
        %v390 = vsel %vm382, %v375, 0.0
        %v391 = vrot.slane %v390, 4
        %v392 = vadd.f32 %v390, %v391
        %v393 = vrot.slane %v392, 2
        %v394 = vadd.f32 %v392, %v393
        %v395 = vrot.slane %v394, 1
        %v396 = vadd.f32 %v394, %v395
        %v397 = vsel %vm382, %v376, 0.0
        %v398 = vrot.slane %v397, 4
        %v399 = vadd.f32 %v397, %v398
        %v400 = vrot.slane %v399, 2
        %v401 = vadd.f32 %v399, %v400
        %v402 = vrot.slane %v401, 1
        %v403 = vadd.f32 %v401, %v402
        %v404 = vsel %vm382, %v377, 0.0
        %v405 = vrot.slane %v404, 4
        %v406 = vadd.f32 %v404, %v405
        %v407 = vrot.slane %v406, 2
        %v408 = vadd.f32 %v406, %v407
        %v409 = vrot.slane %v408, 1
        %v410 = vadd.f32 %v408, %v409
        %v415 = vrot.slane %v396, 7
        %v416 = vrot.slane %v403, 6
        %v417 = vrot.slane %v410, 5
        %vm418 = vcmask 1040384
        %v419 = vsel %vm418, %v389, %v415
        %vm420 = vcmask 1042434
        %v421 = vsel %vm420, %v416, %v417
        %v422 = vsel %vm382, %v419, %v421
        %v424 = vadd.f32 %v369, %v422
        %v425 = vlaneseq
        %vm426 = vcmp.ge.s32.totalorder %v425, 0
        %vm427 = vcmp.lt.s32.totalorder %v425, 512
        %vm428 = vmand %vm426, %vm427
        %429 = vst.msk [vmem:[%s343] sm:$0xf] %vm428, %v424
        %v430 = vld [vmem:[%s350] sm:$0xf]
        %v431 = vadd.f32 %v366, %v367
        %v432 = vmul.f32 %v431, %v368
        %434 = vst [vmem:[#allocation1] ss:$4 sm:$0xff] %v432
        %v435 = vld.sshfl [vmem:[#allocation1] sm:$0xff pattern:$0x73625140]
        %v436 = vld.sshfl [vmem:[#allocation1 + $0x8] sm:$0xff pattern:$0x73625140]
        %v437 = vld.sshfl [vmem:[#allocation1 + $0x10] sm:$0xff pattern:$0x73625140]
        %v438 = vld.sshfl [vmem:[#allocation1 + $0x18] sm:$0xff pattern:$0x73625140]
        %v443 = vsel %vm382, %v435, 0.0
        %v444 = vrot.slane %v443, 4
        %v445 = vadd.f32 %v443, %v444
        %v446 = vrot.slane %v445, 2
        %v447 = vadd.f32 %v445, %v446
        %v448 = vrot.slane %v447, 1
        %v449 = vadd.f32 %v447, %v448
        %v450 = vsel %vm382, %v436, 0.0
        %v451 = vrot.slane %v450, 4
        %v452 = vadd.f32 %v450, %v451
        %v453 = vrot.slane %v452, 2
        %v454 = vadd.f32 %v452, %v453
        %v455 = vrot.slane %v454, 1
        %v456 = vadd.f32 %v454, %v455
        %v457 = vsel %vm382, %v437, 0.0
        %v458 = vrot.slane %v457, 4
        %v459 = vadd.f32 %v457, %v458
        %v460 = vrot.slane %v459, 2
        %v461 = vadd.f32 %v459, %v460
        %v462 = vrot.slane %v461, 1
        %v463 = vadd.f32 %v461, %v462
        %v464 = vsel %vm382, %v438, 0.0
        %v465 = vrot.slane %v464, 4
        %v466 = vadd.f32 %v464, %v465
        %v467 = vrot.slane %v466, 2
        %v468 = vadd.f32 %v466, %v467
        %v469 = vrot.slane %v468, 1
        %v470 = vadd.f32 %v468, %v469
        %v475 = vrot.slane %v456, 7
        %v476 = vrot.slane %v463, 6
        %v477 = vrot.slane %v470, 5
        %v478 = vsel %vm418, %v449, %v475
        %v479 = vsel %vm420, %v476, %v477
        %v480 = vsel %vm382, %v478, %v479
        %v482 = vadd.f32 %v430, %v480
        %483 = vst.msk [vmem:[%s350] sm:$0xf] %vm428, %v482
        %s484 = sand.u32 %s147, 1
        %s485 = scalar_lea.sflag [#allocation4], %s484
        %s486 = sand.u32 %s147, 1
        %s487 = smul.addr %s486, 4
        %s488 = scalar_lea.vmem [#allocation8], %s487
        %s489 = sand.u32 %s175, 1
        %s490 = scalar_lea.sflag [#allocation10], %s489
        %s491 = sand.u32 %s175, 1
        %s492 = smul.addr %s491, 4
        %s493 = scalar_lea.vmem [#allocation9], %s492
        // Predicated region
        $region49: #{tpu_custom_call.1} parent=31 // pred_check
          %p494 = pneg %p157
        $region50: #{tpu_custom_call.1} parent=31 // pred_check_branch
          %496 = sbr.rel (%p494) target = $region52
        $region51: #{tpu_custom_call.1} parent=31 // pred_region
          %s497 = smul.u32 4, %s34
          %499 = vsyncadd %s485, 0
          %s500 = smul.addr %s33, 4
          %s501 = sadd.s32 %s497, %s500
          %s502 = scalar_lea.hbm %s3, %s501
          %s504 = sshll.u32 %s488, 4
          %s505 = int_to_ptr.vmem [resolvable:$true] %s504
          %s506 = sshll.u32 %s502, 4
          %s507 = int_to_ptr.hbm [resolvable:$true] %s506
          %509 = dma.vmem_to_hbm [thread:$0]  %s505, 64, %s507, %s485
        $region52: #{tpu_custom_call.1} parent=31 // pred_fallthru
          _
        // Predicated region
        $region53: #{tpu_custom_call.1} parent=31 // pred_check
          %p510 = pneg %p185
        $region54: #{tpu_custom_call.1} parent=31 // pred_check_branch
          %512 = sbr.rel (%p510) target = $region56
        $region55: #{tpu_custom_call.1} parent=31 // pred_region
          %s513 = smul.u32 4, %s34
          %515 = vsyncadd %s490, 0
          %s516 = smul.addr %s33, 4
          %s517 = sadd.s32 %s513, %s516
          %s518 = scalar_lea.hbm %s4, %s517
          %s520 = sshll.u32 %s493, 4
          %s521 = int_to_ptr.vmem [resolvable:$true] %s520
          %s522 = sshll.u32 %s518, 4
          %s523 = int_to_ptr.hbm [resolvable:$true] %s522
          %525 = dma.vmem_to_hbm [thread:$0]  %s521, 64, %s523, %s490
        $region56: #{tpu_custom_call.1} parent=31 // pred_fallthru
          _
      $region32: #{tpu_custom_call.1} parent=5 // pred_fallthru
        _
      %p526 = scmp.le.s32.totalorder 2, %s23
      // Predicated region
      $region57: #{tpu_custom_call.1} parent=5 // pred_check
        %p527 = pneg %p526
      $region58: #{tpu_custom_call.1} parent=5 // pred_check_branch
        %529 = sbr.rel (%p527) target = $region60
      $region59: #{tpu_custom_call.1} parent=5 // pred_region
        %s530 = ssub.s32 %s23, 2
        // Predicated region
        $region61: #{tpu_custom_call.1} parent=59 // pred_check
          %p531 = pneg %p163
        $region62: #{tpu_custom_call.1} parent=59 // pred_check_branch
          %533 = sbr.rel (%p531) target = $region64
        $region63: #{tpu_custom_call.1} parent=59 // pred_region
          %s534 = sand.u32 %s148, 1
          %s535 = scalar_lea.sflag [#allocation4], %s534
          %s536 = sand.u32 %s148, 1
          %s537 = smul.addr %s536, 4
          %s538 = scalar_lea.vmem [#allocation8], %s537
          %540 = dma.done %s535, 64
        $region64: #{tpu_custom_call.1} parent=59 // pred_fallthru
          _
        // Predicated region
        $region65: #{tpu_custom_call.1} parent=59 // pred_check
          %p541 = pneg %p191
        $region66: #{tpu_custom_call.1} parent=59 // pred_check_branch
          %543 = sbr.rel (%p541) target = $region68
        $region67: #{tpu_custom_call.1} parent=59 // pred_region
          %s544 = sand.u32 %s176, 1
          %s545 = scalar_lea.sflag [#allocation10], %s544
          %s546 = sand.u32 %s176, 1
          %s547 = smul.addr %s546, 4
          %s548 = scalar_lea.vmem [#allocation9], %s547
          %550 = dma.done %s545, 64
        $region68: #{tpu_custom_call.1} parent=59 // pred_fallthru
          _
      $region60: #{tpu_custom_call.1} parent=5 // pred_fallthru
        _
    $region6: #{tpu_custom_call.1} parent=1 // loop_footer
      %s27 = sadd.s32 1, %s23
    $region7: #{tpu_custom_call.1} parent=1 // loop_footer_branch
      %22 = sbr.rel target = $region3
    $region8: #{tpu_custom_call.1} parent=1 // loop_exit
      _
    %551 = vsyncpa [#allocation3], 1
    %s552 = scalar_lea.sflag [#allocation3], 1
    %553 = vsyncpa %s552, 1
    %554 = vsyncpa [#allocation6], 1
    %s555 = scalar_lea.sflag [#allocation6], 1
    %556 = vsyncpa %s555, 1
    %557 = vsyncpa [#allocation4], 1
    %s558 = scalar_lea.sflag [#allocation4], 1
    %559 = vsyncpa %s558, 1
    %560 = vsyncpa [#allocation10], 1
    %s561 = scalar_lea.sflag [#allocation10], 1
    %562 = vsyncpa %s561, 1

</llo_original>
